<compile_context>
chip_gen: v7x
topology: tpu7x:2x2x1
jax: 0.10.0
libtpu: 0.0.40
codegen_flags: <defaults>
</compile_context>

<pallas_src>
import numpy as np
import jax
import jax.numpy as jnp
from jax.experimental import pallas as pl
from jax.experimental.pallas import tpu as pltpu


def _round_up(x, m):
    return ((x + m - 1) // m) * m


def _mixer_varpool_kernel(x_ref, p_ref, o_ref):
    """Fused variance pooling for one (group, row-tile) grid cell.

    x_ref: (1, tm, L)  f32  rows = flattened (batch, channel) of one group
    p_ref: (1, L, Tp)  f32  columns = avg-pool windows (zero past the real T)
    o_ref: (1, tm, Tp) f32  variance = E[x^2] - E[x]^2 per window
    """
    x = x_ref[0]                                   # (tm, L)
    p = p_ref[0]                                   # (L, Tp)
    tm = x.shape[0]
    # Single MXU matmul for both avg-pools: stack x*x and x along sublanes so
    # the RHS (P) is pushed into the weight registers only once per tile.
    xs = jnp.concatenate([x * x, x], axis=0)                        # (2*tm, L)
    r = jnp.dot(xs, p, preferred_element_type=jnp.float32)          # (2*tm, Tp)
    mean_of_sq = r[:tm]
    mean = r[tm:]
    o_ref[0] = mean_of_sq - mean * mean


def _build_pool_matrices(L, kernel_sizes, strides, Ts, Tp):
    """Host-side (G, L, Tp) stack of avg-pool matrices, zero-padded on T."""
    G = len(kernel_sizes)
    P = np.zeros((G, L, Tp), dtype=np.float32)
    for g, (k, s, T) in enumerate(zip(kernel_sizes, strides, Ts)):
        for t in range(T):
            P[g, t * s:t * s + k, t] = 1.0 / k
    return jnp.asarray(P)


def _pick_row_tile(M, L, Tp, budget_bytes=24 << 20):
    """Largest 8-aligned row tile whose double-buffered working set fits in
    scoped VMEM on every generation (including v7x's 64 MiB physical)."""
    m8 = _round_up(M, 8)
    for tm in (512, 256, 128, 64, 32, 16, 8):
        need = 4 * (2 * tm * L + 2 * L * Tp + 2 * tm * Tp)
        if tm <= m8 and need <= budget_bytes:
            return tm
    return 8


def mixer1d_forward(x, kernel_sizes):
    """Mixer1D.forward: split channels into len(kernel_sizes) groups, apply
    VarPool1D(k, stride=int(k/2)) per group, Flatten(start_dim=1), concat."""
    B, d, L = x.shape
    G = len(kernel_sizes)
    # TODO(synk): torch.split allows a ragged last chunk when d % G != 0;
    # here we require exact divisibility (the common/intended configuration).
    assert d % G == 0, "channel count must be divisible by number of groups"
    c = d // G

    strides = [max(int(k / 2), 1) for k in kernel_sizes]
    Ts = [(L - k) // s + 1 for k, s in zip(kernel_sizes, strides)]
    assert min(Ts) >= 1, "sequence too short for the given kernel sizes"
    Tp = _round_up(max(Ts), 128)            # lane-dense padded output width

    P = _build_pool_matrices(L, kernel_sizes, strides, Ts, Tp)   # (G, L, Tp)

    # (B, d, L) -> (G, M, L) with M = B*c rows per group (batch outer, ch inner).
    M = B * c
    xg = (x.astype(jnp.float32)
            .reshape(B, G, c, L)
            .transpose(1, 0, 2, 3)
            .reshape(G, M, L))

    tm = _pick_row_tile(M, L, Tp)
    M_pad = _round_up(M, tm)
    if M_pad != M:
        xg = jnp.pad(xg, ((0, 0), (0, M_pad - M), (0, 0)))

    grid = (G, M_pad // tm)

    # VMEM budget: double-buffered x / P / out tiles + intermediate headroom.
    block_bytes = 4 * (2 * tm * L + 2 * L * Tp + 2 * tm * Tp)
    vmem_limit = int(min(max(4 * block_bytes, 8 << 20), 64 << 20))

    out = pl.pallas_call(
        _mixer_varpool_kernel,
        out_shape=jax.ShapeDtypeStruct((G, M_pad, Tp), jnp.float32),
        grid=grid,
        in_specs=[
            pl.BlockSpec((1, tm, L), lambda g, i: (g, i, 0)),
            # P depends only on the group axis -> stays VMEM-resident across
            # the inner (row-tile) grid axis.
            pl.BlockSpec((1, L, Tp), lambda g, i: (g, 0, 0)),
        ],
        out_specs=pl.BlockSpec((1, tm, Tp), lambda g, i: (g, i, 0)),
        compiler_params=pltpu.CompilerParams(
            dimension_semantics=("parallel", "parallel"),
            vmem_limit_bytes=vmem_limit),
    )(xg, P)

    # Slice away row / lane padding, flatten per group, concat along dim=1.
    pieces = []
    for g, T in enumerate(Ts):
        v = out[g, :M, :T].reshape(B, c, T)          # (B, c, T_g)
        pieces.append(v.reshape(B, c * T))           # Flatten(start_dim=1)
    return jnp.concatenate(pieces, axis=1)


# ----------------------------- pure-JAX reference -----------------------------

def _ref_varpool(xg, k, s):
    B, C, L = xg.shape
    T = (L - k) // s + 1
    idx = jnp.arange(T)[:, None] * s + jnp.arange(k)[None, :]      # (T, k)
    w = xg[:, :, idx]                                              # (B, C, T, k)
    mean = w.mean(-1)
    return (w * w).mean(-1) - mean * mean


def _ref_mixer1d(x, kernel_sizes):
    B, d, L = x.shape
    c = d // len(kernel_sizes)
    outs = []
    for i, k in enumerate(kernel_sizes):
        xg = x[:, i * c:(i + 1) * c, :].astype(jnp.float32)
        outs.append(_ref_varpool(xg, k, max(int(k / 2), 1)).reshape(B, -1))
    return jnp.concatenate(outs, axis=1)


if __name__ == "__main__":
    # Small shapes consistent with the module: B=2, d=6 channels split into 3
    # groups of 2, sequence L=32, kernel_sizes scaled down from [50,100,250].
    B, d, L = 2, 6, 32
    kernel_sizes = [4, 8, 16]        # Mixer1D has no learnable parameters

    key = jax.random.PRNGKey(0)
    x = jax.random.normal(key, (B, d, L), dtype=jnp.float32)

    fwd = jax.jit(lambda xx: mixer1d_forward(xx, kernel_sizes))
    y = jax.block_until_ready(fwd(x))

    y_ref = _ref_mixer1d(x, kernel_sizes)
    assert y.shape == y_ref.shape, (y.shape, y_ref.shape)
    assert jnp.allclose(y, y_ref, atol=1e-5, rtol=1e-5), "mismatch vs reference"

    print("KERNEL_OK")
</pallas_src>

<mosaic_0001>
module attributes {stable_mosaic.version = 11 : i64} {
  func.func @_mixer_varpool_kernel(%arg0: i32, %arg1: i32, %arg2: memref<1x8x32xf32, #tpu.memory_space<vmem>>, %arg3: memref<1x32x128xf32, #tpu.memory_space<vmem>>, %arg4: memref<1x8x128xf32, #tpu.memory_space<vmem>>) attributes {dimension_semantics = [#tpu.dimension_semantics<parallel>, #tpu.dimension_semantics<parallel>], iteration_bounds = array<i64: 3, 1>, scalar_prefetch = 0 : i64, scratch_operands = 0 : i64, tpu.core_type = #tpu.core_type<tc>, window_params = [{transform_indices = @transform_0, window_bounds = array<i64: 1, 8, 32>}, {transform_indices = @transform_1, window_bounds = array<i64: 1, 32, 128>}, {transform_indices = @transform_2, window_bounds = array<i64: 1, 8, 128>}]} {
    %c0 = arith.constant 0 : index
    %c0_0 = arith.constant 0 : index
    %c0_1 = arith.constant 0 : index
    %0 = vector.load %arg2[%c0, %c0_0, %c0_1] : memref<1x8x32xf32, #tpu.memory_space<vmem>>, vector<1x8x32xf32>
    %1 = vector.shape_cast %0 : vector<1x8x32xf32> to vector<8x32xf32>
    %c0_2 = arith.constant 0 : index
    %c0_3 = arith.constant 0 : index
    %c0_4 = arith.constant 0 : index
    %2 = vector.load %arg3[%c0_2, %c0_3, %c0_4] : memref<1x32x128xf32, #tpu.memory_space<vmem>>, vector<1x32x128xf32>
    %3 = vector.shape_cast %2 : vector<1x32x128xf32> to vector<32x128xf32>
    %4 = arith.mulf %1, %1 : vector<8x32xf32>
    %5 = tpu.concatenate %4, %1 in 0 : vector<8x32xf32>, vector<8x32xf32> -> vector<16x32xf32>
    %cst = arith.constant dense<0.000000e+00> : vector<16x128xf32>
    %6 = tpu.matmul %5, %3, %cst {dimension_numbers = #tpu.dot_dimension_numbers<[1], [0], [0], [1], [0, 0, 1, 1], [], []>} : vector<16x32xf32>, vector<32x128xf32>, vector<16x128xf32> -> vector<16x128xf32>
    %7 = vector.extract_strided_slice %6 {offsets = [0, 0], sizes = [8, 128], strides = [1, 1]} : vector<16x128xf32> to vector<8x128xf32>
    %8 = vector.extract_strided_slice %6 {offsets = [8, 0], sizes = [8, 128], strides = [1, 1]} : vector<16x128xf32> to vector<8x128xf32>
    %9 = arith.mulf %8, %8 : vector<8x128xf32>
    %10 = arith.subf %7, %9 : vector<8x128xf32>
    %c0_5 = arith.constant 0 : index
    %c0_6 = arith.constant 0 : index
    %c0_7 = arith.constant 0 : index
    %11 = vector.load %arg4[%c0_5, %c0_6, %c0_7] : memref<1x8x128xf32, #tpu.memory_space<vmem>>, vector<1x8x128xf32>
    %12 = vector.shape_cast %11 : vector<1x8x128xf32> to vector<8x128xf32>
    %13 = vector.shape_cast %10 : vector<8x128xf32> to vector<1x8x128xf32>
    tpu.vector_store %arg4[%c0_5, %c0_6, %c0_7], %13 {strides = array<i32>} : memref<1x8x128xf32, #tpu.memory_space<vmem>>, vector<1x8x128xf32>,
    return
  }
  func.func @transform_0(%arg0: i32, %arg1: i32) -> (i32, i32, i32) {
    %c0_i32 = arith.constant 0 : i32
    %c0_i32_0 = arith.constant 0 : i32
    return %arg0, %arg1, %c0_i32 : i32, i32, i32
  }
  func.func @transform_1(%arg0: i32, %arg1: i32) -> (i32, i32, i32) {
    %c0_i32 = arith.constant 0 : i32
    %c0_i32_0 = arith.constant 0 : i32
    %c0_i32_1 = arith.constant 0 : i32
    return %arg0, %c0_i32, %c0_i32_0 : i32, i32, i32
  }
  func.func @transform_2(%arg0: i32, %arg1: i32) -> (i32, i32, i32) {
    %c0_i32 = arith.constant 0 : i32
    %c0_i32_0 = arith.constant 0 : i32
    return %arg0, %arg1, %c0_i32 : i32, i32, i32
  }
}

</mosaic_0001>

<llo_original>
// kernel: squeeze.5
$region0: #{squeeze.5}
  %s0 = inlined_call_operand.vmem [shape: f32[1,4,3], index: 0, kind: input, shape index: {}]
  %s1 = inlined_call_operand.vmem [shape: f32[2,6], index: 1, kind: output, shape index: {}]
  $region1: #{squeeze.5} parent=0
    #allocation0 [shape = 'u8[4096]{0}', space=vmem, size = 0x1000, scoped, tag = 'scoped mem for output reshape']
    #allocation1 [shape = 'u8[4096]{0}', space=vmem, size = 0x1000, scoped, tag = 'scoped mem for input reshape']
    %s3 = sshllo.u32 0, 4
    %v4 = vld [vmem:[%s0] sm:%s3]
    %5 = vst [vmem:[#allocation1] sm:%s3] %v4
    %s6 = smov 3
    %v7 = vld [vmem:[#allocation1] ss:$2 sm:%s6]
    %vm8 = vcmask 23552
    %9 = vst.msk [vmem:[#allocation0] sm:$0x3] %vm8, %v7
    %s10 = scalar_lea.vmem [#allocation1], 1
    %s11 = smov 3
    %v12 = vld [vmem:[%s10] ss:$2 sm:%s11]
    %13 = vrot.lane.b32.xlu0 %v12, 3
    %v14 = vpop.permute.xlu0 %13
    %vm15 = vcmask 48152
    %16 = vst.msk [vmem:[#allocation0] sm:$0x3] %vm15, %v14
    %s18 = sshllo.u32 0, 2
    %v20 = vld [vmem:[#allocation0] sm:%s18]
    %s21 = sshllo.u32 0, 2
    %22 = vst [vmem:[%s1] sm:%s21] %v20

// kernel: squeeze.3
$region0: #{squeeze.3}
  %s0 = inlined_call_operand.vmem [shape: f32[1,4,15], index: 0, kind: input, shape index: {}]
  %s1 = inlined_call_operand.vmem [shape: f32[2,30], index: 1, kind: output, shape index: {}]
  $region1: #{squeeze.3} parent=0
    #allocation0 [shape = 'u8[4096]{0}', space=vmem, size = 0x1000, scoped, tag = 'scoped mem for output reshape']
    #allocation1 [shape = 'u8[4096]{0}', space=vmem, size = 0x1000, scoped, tag = 'scoped mem for input reshape']
    %s3 = sshllo.u32 0, 4
    %v4 = vld [vmem:[%s0] sm:%s3]
    %5 = vst [vmem:[#allocation1] sm:%s3] %v4
    %s6 = smov 3
    %v7 = vld [vmem:[#allocation1] ss:$2 sm:%s6]
    %vm8 = vcmask 121856
    %9 = vst.msk [vmem:[#allocation0] sm:$0x3] %vm8, %v7
    %s10 = scalar_lea.vmem [#allocation1], 1
    %s11 = smov 3
    %v12 = vld [vmem:[%s10] ss:$2 sm:%s11]
    %13 = vrot.lane.b32.xlu0 %v12, 15
    %v14 = vpop.permute.xlu0 %13
    %vm15 = vcmask 244856
    %16 = vst.msk [vmem:[#allocation0] sm:$0x3] %vm15, %v14
    %s18 = sshllo.u32 0, 2
    %v20 = vld [vmem:[#allocation0] sm:%s18]
    %s21 = sshllo.u32 0, 2
    %22 = vst [vmem:[%s1] sm:%s21] %v20

// kernel: squeeze.4
$region0: #{squeeze.4}
  %s0 = inlined_call_operand.vmem [shape: f32[1,4,7], index: 0, kind: input, shape index: {}]
  %s1 = inlined_call_operand.vmem [shape: f32[2,14], index: 1, kind: output, shape index: {}]
  $region1: #{squeeze.4} parent=0
    #allocation0 [shape = 'u8[4096]{0}', space=vmem, size = 0x1000, scoped, tag = 'scoped mem for output reshape']
    #allocation1 [shape = 'u8[4096]{0}', space=vmem, size = 0x1000, scoped, tag = 'scoped mem for input reshape']
    %s3 = sshllo.u32 0, 4
    %v4 = vld [vmem:[%s0] sm:%s3]
    %5 = vst [vmem:[#allocation1] sm:%s3] %v4
    %s6 = smov 3
    %v7 = vld [vmem:[#allocation1] ss:$2 sm:%s6]
    %vm8 = vcmask 56320
    %9 = vst.msk [vmem:[#allocation0] sm:$0x3] %vm8, %v7
    %s10 = scalar_lea.vmem [#allocation1], 1
    %s11 = smov 3
    %v12 = vld [vmem:[%s10] ss:$2 sm:%s11]
    %13 = vrot.lane.b32.xlu0 %v12, 7
    %v14 = vpop.permute.xlu0 %13
    %vm15 = vcmask 113720
    %16 = vst.msk [vmem:[#allocation0] sm:$0x3] %vm15, %v14
    %s18 = sshllo.u32 0, 2
    %v20 = vld [vmem:[#allocation0] sm:%s18]
    %s21 = sshllo.u32 0, 2
    %22 = vst [vmem:[%s1] sm:%s21] %v20

// kernel: _lambda_.1
$region0: #{_lambda_.1}
  #allocation0 [shape = 'u32[]', space=smem, size = 0x4, offset = 0x4, fixed_abs, tag = 'smem constant byte address 0x4 - core index']
  #allocation1 [shape = 'u32[144,128]{1,0:T(1,128)}', space=vmem, size = 0x12000, scoped, tag = 'internal scratch']
  %s0 = inlined_call_operand.vmem [shape: f32[3,8,32], index: 0, kind: input, shape index: {}]
  %s1 = inlined_call_operand.hbm [shape: f32[3,32,128], index: 1, kind: input, shape index: {}]
  %s2 = inlined_call_operand.vmem [shape: f32[3,8,128], index: 2, kind: output, shape index: {}]
  %s3 = sld [smem:[#allocation0]]
  $region45: #{_lambda_.1} parent=0
    _
  %s5 = ssub.s32 1, %s3
  %s6 = scalar_select 0, %s5, %s3
  $region1: #{_lambda_.1} parent=0
    #allocation2 [shape = 'u8[32768]{0}', space=vmem, size = 0x8000, scoped, tag = 'input window, operand 1']
    #allocation3 [shape = 's32[2]{0}', space=sflag, size = 0x8, scoped, tag = 'scoped memory for _lambda_.1']
    %7 = vsyncpa [#allocation3], 0
    %s8 = scalar_lea.sflag [#allocation3], 1
    %9 = vsyncpa %s8, 0
    loop: start=0, step=1, limit=5
    $region2: #{_lambda_.1} parent=1 // loop_pre_header
      _
    $region3: #{_lambda_.1} parent=1 // loop_header
      %s11 = sphi 0, %s15
      %p12 = scmp.ge.s32.totalorder %s11, 5
      %s18 = sphi 0, %s30
      %s19 = sphi 0, %s26
      %s20 = sphi 0, %s18
      %s21 = sphi 0, %s19
      %s22 = sphi 0, %s20
      %s23 = sphi 0, %s21
      %s35 = sphi 0, %s37
      %s38 = sphi 0, %s35
      %s39 = sphi 0, %s38
      %s55 = sphi 0, %s39
      %s61 = sphi 0, %s63
      %s64 = sphi 0, %s61
      %s65 = sphi 0, %s64
      %s81 = sphi 0, %s65
      %s89 = sphi 0, %s91
      %s92 = sphi 0, %s89
      %s93 = sphi 0, %s92
      %s109 = sphi 0, %s93
    $region4: #{_lambda_.1} parent=1 // loop_header_branch
      %14 = sbr.rel (%p12) target = $region8
    $region5: #{_lambda_.1} parent=1 // loop_body
      %s16 = ssub.s32 %s11, 1
      %s17 = ssub.s32 %s11, 2
      %s24 = sadd.s32 1, %s19
      %p25 = scmp.ge.s32.totalorder %s24, 1
      %s26 = scalar_select %p25, 0, %s24
      %s27 = sadd.s32 1, %s18
      %s28 = scalar_select %p25, %s27, %s18
      %p29 = scmp.ge.s32.totalorder %s28, 3
      %s30 = scalar_select %p29, 0, %s28
      %s31 = ssub.s32 %s18, %s30
      %s32 = ssub.s32 %s19, %s26
      %s33 = sor.u32 %s31, %s32
      %p34 = scmp.eq.s32.totalorder %s33, 0
      %s36 = sadd.s32 %s35, 1
      %s37 = scalar_select %p34, %s35, %s36
      %p40 = pneg %p34
      %p41 = scmp.eq.s32.totalorder %s11, 2
      %p42 = por %p40, %p41
      %p43 = scmp.ne.s32.totalorder %s35, %s38
      %p44 = scmp.eq.s32.totalorder %s11, 0
      %p45 = por %p43, %p44
      %p46 = scmp.ne.s32.totalorder %s35, %s38
      %p47 = scmp.eq.s32.totalorder %s16, 2
      %p48 = por %p46, %p47
      %p49 = scmp.ne.s32.totalorder %s38, %s39
      %p50 = scmp.eq.s32.totalorder %s16, 0
      %p51 = por %p49, %p50
      %p52 = scmp.ne.s32.totalorder %s38, %s39
      %p53 = scmp.eq.s32.totalorder %s17, 2
      %p54 = por %p52, %p53
      %p56 = scmp.ne.s32.totalorder %s39, %s55
      %p57 = scmp.eq.s32.totalorder %s17, 0
      %p58 = por %p56, %p57
      %s59 = ssub.s32 %s18, %s30
      %p60 = scmp.eq.s32.totalorder %s59, 0
      %s62 = sadd.s32 %s61, 1
      %s63 = scalar_select %p60, %s61, %s62
      %p66 = pneg %p60
      %p67 = scmp.eq.s32.totalorder %s11, 2
      %p68 = por %p66, %p67
      %p69 = scmp.ne.s32.totalorder %s61, %s64
      %p70 = scmp.eq.s32.totalorder %s11, 0
      %p71 = por %p69, %p70
      %p72 = scmp.ne.s32.totalorder %s61, %s64
      %p73 = scmp.eq.s32.totalorder %s16, 2
      %p74 = por %p72, %p73
      %p75 = scmp.ne.s32.totalorder %s64, %s65
      %p76 = scmp.eq.s32.totalorder %s16, 0
      %p77 = por %p75, %p76
      %p78 = scmp.ne.s32.totalorder %s64, %s65
      %p79 = scmp.eq.s32.totalorder %s17, 2
      %p80 = por %p78, %p79
      %p82 = scmp.ne.s32.totalorder %s65, %s81
      %p83 = scmp.eq.s32.totalorder %s17, 0
      %p84 = por %p82, %p83
      %s85 = ssub.s32 %s18, %s30
      %s86 = ssub.s32 %s19, %s26
      %s87 = sor.u32 %s85, %s86
      %p88 = scmp.eq.s32.totalorder %s87, 0
      %s90 = sadd.s32 %s89, 1
      %s91 = scalar_select %p88, %s89, %s90
      %p94 = pneg %p88
      %p95 = scmp.eq.s32.totalorder %s11, 2
      %p96 = por %p94, %p95
      %p97 = scmp.ne.s32.totalorder %s89, %s92
      %p98 = scmp.eq.s32.totalorder %s11, 0
      %p99 = por %p97, %p98
      %p100 = scmp.ne.s32.totalorder %s89, %s92
      %p101 = scmp.eq.s32.totalorder %s16, 2
      %p102 = por %p100, %p101
      %p103 = scmp.ne.s32.totalorder %s92, %s93
      %p104 = scmp.eq.s32.totalorder %s16, 0
      %p105 = por %p103, %p104
      %p106 = scmp.ne.s32.totalorder %s92, %s93
      %p107 = scmp.eq.s32.totalorder %s17, 2
      %p108 = por %p106, %p107
      %p110 = scmp.ne.s32.totalorder %s93, %s109
      %p111 = scmp.eq.s32.totalorder %s17, 0
      %p112 = por %p110, %p111
      %p113 = scmp.le.s32.totalorder 1, %s11
      %p114 = scmp.lt.s32.totalorder %s11, 4
      %p115 = pnand %p113, %p114
      %p116 = pneg %p115
      // Predicated region
      $region9: #{_lambda_.1} parent=5 // pred_check
        _
      $region10: #{_lambda_.1} parent=5 // pred_check_branch
        %118 = sbr.rel (%p115) target = $region12
      $region11: #{_lambda_.1} parent=5 // pred_region
        %s119 = ssub.s32 %s11, 1
      $region12: #{_lambda_.1} parent=5 // pred_fallthru
        _
      %p120 = scmp.lt.s32.totalorder %s11, 3
      // Predicated region
      $region13: #{_lambda_.1} parent=5 // pred_check
        %p121 = pneg %p120
      $region14: #{_lambda_.1} parent=5 // pred_check_branch
        %123 = sbr.rel (%p121) target = $region16
      $region15: #{_lambda_.1} parent=5 // pred_region
        // Predicated region
        $region17: #{_lambda_.1} parent=15 // pred_check
          %p124 = pneg %p45
        $region18: #{_lambda_.1} parent=15 // pred_check_branch
          %126 = sbr.rel (%p124) target = $region20
        $region19: #{_lambda_.1} parent=15 // pred_region
          %p127 = scmp.lt.s32.totalorder %s18, 2
          %s128 = scalar_select %p127, %s18, 2
          %p129 = scmp.lt.s32.totalorder %s19, 0
          %s130 = scalar_select %p129, %s19, 0
          %s131 = sadd.s32 %s130, %s128
          %s132 = smul.addr %s131, 8
          %s133 = scalar_lea.vmem %s0, %s132
        $region20: #{_lambda_.1} parent=15 // pred_fallthru
          _
        // Predicated region
        $region21: #{_lambda_.1} parent=15 // pred_check
          %p134 = pneg %p71
        $region22: #{_lambda_.1} parent=15 // pred_check_branch
          %136 = sbr.rel (%p134) target = $region24
        $region23: #{_lambda_.1} parent=15 // pred_region
          %s137 = sand.u32 %s61, 1
          %s138 = scalar_lea.sflag [#allocation3], %s137
          %s139 = sand.u32 %s61, 1
          %s140 = smul.addr %s139, 32
          %s141 = scalar_lea.vmem [#allocation2], %s140
          %s143 = ssub.s32 512, 512
          %144 = vsyncadd %s138, %s143
          %s145 = smul.addr %s18, 4
          %s146 = smul.addr %s145, 128
          %s147 = scalar_lea.hbm %s1, %s146
          %s148 = sshll.u32 %s141, 4
          %s149 = int_to_ptr.vmem [resolvable:$true] %s148
          %154 = dma.hbm_to_vmem [thread:$0]  %s147, 512, %s149, %s138, 128, 128, 8
        $region24: #{_lambda_.1} parent=15 // pred_fallthru
          _
      $region16: #{_lambda_.1} parent=5 // pred_fallthru
        _
      %p155 = scmp.le.s32.totalorder 1, %s11
      %p156 = scmp.lt.s32.totalorder %s11, 4
      %p157 = pnand %p155, %p156
      %p158 = pneg %p157
      // Predicated region
      $region25: #{_lambda_.1} parent=5 // pred_check
        _
      $region26: #{_lambda_.1} parent=5 // pred_check_branch
        %160 = sbr.rel (%p157) target = $region28
      $region27: #{_lambda_.1} parent=5 // pred_region
        %s161 = ssub.s32 %s11, 1
        %s162 = sand.u32 %s64, 1
        %s163 = scalar_lea.sflag [#allocation3], %s162
        %s164 = sand.u32 %s64, 1
        %s165 = smul.addr %s164, 32
        %s166 = scalar_lea.vmem [#allocation2], %s165
        // Predicated region
        $region29: #{_lambda_.1} parent=27 // pred_check
          %p167 = pneg %p77
        $region30: #{_lambda_.1} parent=27 // pred_check_branch
          %169 = sbr.rel (%p167) target = $region32
        $region31: #{_lambda_.1} parent=27 // pred_region
          %170 = dma.done %s163, 512
        $region32: #{_lambda_.1} parent=27 // pred_fallthru
          _
        %p171 = scmp.lt.s32.totalorder %s20, 2
        %s172 = scalar_select %p171, %s20, 2
        %p173 = scmp.lt.s32.totalorder %s21, 0
        %s174 = scalar_select %p173, %s21, 0
        %s175 = sadd.s32 %s174, %s172
        %s176 = smul.addr %s175, 8
        %s177 = scalar_lea.vmem %s0, %s176
        %p178 = pneg %p51
        %p179 = pneg %p48
        %s180 = sand.u32 %s64, 1
        %s181 = scalar_lea.sflag [#allocation3], %s180
        %s182 = sand.u32 %s64, 1
        %s183 = smul.addr %s182, 32
        %s184 = scalar_lea.vmem [#allocation2], %s183
        %p185 = pneg %p77
        %p186 = pneg %p74
        %p187 = pneg %p105
        %p188 = pneg %p102
        %p189 = scmp.lt.s32.totalorder %s20, 2
        %s190 = scalar_select %p189, %s20, 2
        %p191 = scmp.lt.s32.totalorder %s21, 0
        %s192 = scalar_select %p191, %s21, 0
        %s193 = sadd.s32 %s192, %s190
        %s194 = smul.addr %s193, 8
        %s195 = scalar_lea.vmem %s2, %s194
        %p196 = scmp.lt.s32.totalorder %s20, 2
        %s197 = scalar_select %p196, %s20, 2
        %p198 = scmp.lt.s32.totalorder %s21, 0
        %s199 = scalar_select %p198, %s21, 0
        %s200 = sadd.s32 %s199, %s197
        %s201 = smul.addr %s200, 8
        %s202 = scalar_lea.vmem %s0, %s201
        %p203 = scmp.lt.s32.totalorder %s20, 2
        %s204 = scalar_select %p203, %s20, 2
        %p205 = scmp.lt.s32.totalorder %s21, 0
        %s206 = scalar_select %p205, %s21, 0
        %s207 = sadd.s32 %s206, %s204
        %s208 = smul.addr %s207, 8
        %s209 = scalar_lea.vmem %s2, %s208
        %v210 = vld [vmem:[%s202] sm:$0xff]
        %v211 = vld [vmem:[%s166] sm:$0xff]
        %v212 = vld [vmem:[%s166 + $0x8] sm:$0xff]
        %v213 = vld [vmem:[%s166 + $0x10] sm:$0xff]
        %v214 = vld [vmem:[%s166 + $0x18] sm:$0xff]
        %v215 = vmul.f32 %v210, %v210
        %vm216 = vcmask 261120
        %v218 = vsel %vm216, %v215, 0
        %v221 = vsel %vm216, %v210, 0
        %223 = vmatprep.subr.mxu0 0.0
        %224 = vmatpush1.msra.mxu0 %v211
        %225 = vmatprep.subr.mxu0 0.0
        %226 = vmatpush1.msra.mxu0 %v212
        %227 = vmatprep.subr.mxu0 0.0
        %228 = vmatpush1.msra.mxu0 %v213
        %229 = vmatprep.subr.mxu0 0.0
        %230 = vmatpush1.msra.mxu0 %v214
        %231 = vmatprep.subr.mxu0 0.0
        %232 = vmatpush1.msra.mxu0 0.0
        %233 = vmatprep.subr.mxu0 0.0
        %234 = vmatpush1.msra.mxu0 0.0
        %235 = vmatprep.subr.mxu0 0.0
        %236 = vmatpush1.msra.mxu0 0.0
        %237 = vmatprep.subr.mxu0 0.0
        %238 = vmatpush1.msra.mxu0 0.0
        %239 = vmatprep.subr.mxu0 0.0
        %240 = vmatpush1.msra.mxu0 0.0
        %241 = vmatprep.subr.mxu0 0.0
        %242 = vmatpush1.msra.mxu0 0.0
        %243 = vmatprep.subr.mxu0 0.0
        %244 = vmatpush1.msra.mxu0 0.0
        %245 = vmatprep.subr.mxu0 0.0
        %246 = vmatpush1.msra.mxu0 0.0
        %247 = vmatprep.subr.mxu0 0.0
        %248 = vmatpush1.msra.mxu0 0.0
        %249 = vmatprep.subr.mxu0 0.0
        %250 = vmatpush1.msra.mxu0 0.0
        %251 = vmatprep.subr.mxu0 0.0
        %252 = vmatpush1.msra.mxu0 0.0
        %253 = vmatprep.subr.mxu0 0.0
        %254 = vmatpush1.msra.mxu0 0.0
        %255 = vmatprep.subr.mxu0 0.0
        %256 = vmatpush1.msra.mxu0 0.0
        %257 = vmatprep.subr.mxu0 0.0
        %258 = vmatpush1.msra.mxu0 0.0
        %259 = vmatprep.subr.mxu0 0.0
        %260 = vmatpush1.msra.mxu0 0.0
        %261 = vmatprep.subr.mxu0 0.0
        %262 = vmatpush1.msra.mxu0 0.0
        %263 = vmatprep.subr.mxu0 0.0
        %264 = vmatpush1.msra.mxu0 0.0
        %265 = vmatprep.subr.mxu0 0.0
        %266 = vmatpush1.msra.mxu0 0.0
        %267 = vmatprep.subr.mxu0 0.0
        %268 = vmatpush1.msra.mxu0 0.0
        %269 = vmatprep.subr.mxu0 0.0
        %270 = vmatpush1.msra.mxu0 0.0
        %271 = vmatprep.subr.mxu0 0.0
        %272 = vmatpush1.msra.mxu0 0.0
        %273 = vmatprep.subr.mxu0 0.0
        %274 = vmatpush1.msra.mxu0 0.0
        %275 = vmatprep.subr.mxu0 0.0
        %276 = vmatpush1.msra.mxu0 0.0
        %277 = vmatprep.subr.mxu0 0.0
        %278 = vmatpush1.msra.mxu0 0.0
        %279 = vmatprep.subr.mxu0 0.0
        %280 = vmatpush1.msra.mxu0 0.0
        %281 = vmatprep.subr.mxu0 0.0
        %282 = vmatpush1.msra.mxu0 0.0
        %283 = vmatprep.subr.mxu0 0.0
        %284 = vmatpush1.msra.mxu0 0.0
        %285 = vmatprep.subr.mxu0 0.0
        %286 = vmatpush1.msra.mxu0 0.0
        %287 = vmatprep.mubr.f32.mxu0 0.0
        %288 = vmatmul.mubr.f32.gmra.mrb[0].mxu0 %v218
        %v289 = vpop.f32.mrb[0].mxu0
        %v290 = vadd.f32 0.0, %v289
        %v291 = vpop.f32.mrb[0].mxu0
        %292 = vmatprep.mubr.f32.mxu0 0.0
        %293 = vmatmul.mubr.f32.gmra.mrb[0].mxu0 %v221
        %v294 = vpop.f32.mrb[0].mxu0
        %v295 = vadd.f32 0.0, %v294
        %v296 = vpop.f32.mrb[0].mxu0
        %297 = vdwg.mxu0
        %v298 = vmul.f32 %v295, %v295
        %v299 = vsub.f32 %v290, %v298
        %300 = vst [vmem:[%s209] sm:$0xff] %v299
        %p301 = scmp.lt.s32.totalorder %s20, 2
        %s302 = scalar_select %p301, %s20, 2
        %p303 = scmp.lt.s32.totalorder %s21, 0
        %s304 = scalar_select %p303, %s21, 0
        %s305 = sadd.s32 %s304, %s302
        %s306 = smul.addr %s305, 8
        %s307 = scalar_lea.vmem %s2, %s306
        // Predicated region
        $region33: #{_lambda_.1} parent=27 // pred_check
          %p308 = pneg %p102
        $region34: #{_lambda_.1} parent=27 // pred_check_branch
          %310 = sbr.rel (%p308) target = $region36
        $region35: #{_lambda_.1} parent=27 // pred_region
          _
        $region36: #{_lambda_.1} parent=27 // pred_fallthru
          _
      $region28: #{_lambda_.1} parent=5 // pred_fallthru
        _
      %p311 = scmp.le.s32.totalorder 2, %s11
      // Predicated region
      $region37: #{_lambda_.1} parent=5 // pred_check
        %p312 = pneg %p311
      $region38: #{_lambda_.1} parent=5 // pred_check_branch
        %314 = sbr.rel (%p312) target = $region40
      $region39: #{_lambda_.1} parent=5 // pred_region
        %s315 = ssub.s32 %s11, 2
        // Predicated region
        $region41: #{_lambda_.1} parent=39 // pred_check
          %p316 = pneg %p108
        $region42: #{_lambda_.1} parent=39 // pred_check_branch
          %318 = sbr.rel (%p316) target = $region44
        $region43: #{_lambda_.1} parent=39 // pred_region
          %p319 = scmp.lt.s32.totalorder %s22, 2
          %s320 = scalar_select %p319, %s22, 2
          %p321 = scmp.lt.s32.totalorder %s23, 0
          %s322 = scalar_select %p321, %s23, 0
          %s323 = sadd.s32 %s322, %s320
          %s324 = smul.addr %s323, 8
          %s325 = scalar_lea.vmem %s2, %s324
        $region44: #{_lambda_.1} parent=39 // pred_fallthru
          _
      $region40: #{_lambda_.1} parent=5 // pred_fallthru
        _
    $region6: #{_lambda_.1} parent=1 // loop_footer
      %s15 = sadd.s32 1, %s11
    $region7: #{_lambda_.1} parent=1 // loop_footer_branch
      %10 = sbr.rel target = $region3
    $region8: #{_lambda_.1} parent=1 // loop_exit
      _
    %326 = vsyncpa [#allocation3], 1
    %s327 = scalar_lea.sflag [#allocation3], 1
    %328 = vsyncpa %s327, 1

</llo_original>
